<compile_context>
chip_gen: v5e
topology: v5e:2x2
jax: 0.10.0
libtpu: 0.0.40
codegen_flags: <defaults>
</compile_context>

<pallas_src>
import math

import jax
import jax.numpy as jnp
from jax.experimental import pallas as pl
from jax.experimental.pallas import tpu as pltpu


# ---------------------------------------------------------------------------
# Materialized-copy kernel: direct HBM -> HBM DMA (no VMEM bounce, no grid).
# ---------------------------------------------------------------------------

_MIN_BYTES_PER_CHUNK = 4 * 1024 * 1024   # only split copies >= ~8 MiB total
_MAX_COPY_CHUNKS = 4                     # a few concurrent DMAs is plenty


def _sublane_multiple(dtype) -> int:
    # Rows per (sublane x 128-lane) tile for this dtype's packing.
    return {4: 8, 2: 16, 1: 32}.get(jnp.dtype(dtype).itemsize, 8)


def _row_chunks(b: int, flat: int, dtype):
    """Static, sublane-aligned row ranges for concurrent HBM->HBM DMAs."""
    itemsize = jnp.dtype(dtype).itemsize
    total_bytes = b * max(flat, 1) * itemsize
    n = int(min(_MAX_COPY_CHUNKS, max(1, total_bytes // _MIN_BYTES_PER_CHUNK)))
    sub = _sublane_multiple(dtype)
    rows = -(-b // n)                # ceil(b / n)
    rows = -(-rows // sub) * sub     # round chunk height up to sublane packing
    chunks = []
    start = 0
    while start < b:
        size = min(rows, b - start)
        chunks.append((start, size))
        start += size
    return chunks


def _make_hbm_copy_kernel(chunks):
    n = len(chunks)

    def kernel(x_hbm, o_hbm):
        # Both refs live in HBM (memory_space=pl.ANY).  Issue one contiguous
        # DMA per chunk (all in flight at once), then wait on all of them.
        def issue_and_wait(sems):
            copies = []
            for c, (start, size) in enumerate(chunks):
                if n == 1:
                    src, dst = x_hbm, o_hbm          # whole-array DMA
                else:
                    src = x_hbm.at[pl.ds(start, size), :]
                    dst = o_hbm.at[pl.ds(start, size), :]
                cp = pltpu.make_async_copy(src, dst, sems.at[c])
                cp.start()
                copies.append(cp)
            for cp in copies:
                cp.wait()

        pl.run_scoped(issue_and_wait, pltpu.SemaphoreType.DMA((n,)))

    return kernel


def _materialized_copy(x2d: jax.Array) -> jax.Array:
    b, flat = x2d.shape
    chunks = _row_chunks(b, flat, x2d.dtype)
    return pl.pallas_call(
        _make_hbm_copy_kernel(chunks),
        out_shape=jax.ShapeDtypeStruct((b, flat), x2d.dtype),
        in_specs=[pl.BlockSpec(memory_space=pl.ANY)],
        out_specs=pl.BlockSpec(memory_space=pl.ANY),
    )(x2d)


# ---------------------------------------------------------------------------
# Public wrapper: matches torch Flatten.forward semantics.
# ---------------------------------------------------------------------------

def flatten_pallas(x: jax.Array, *, materialize: bool = False) -> jax.Array:
    """Pallas equivalent of torch: x.view(x.size(0), -1).

    Default (materialize=False): pure metadata reshape, no kernel launch.
    materialize=True: copies into a fresh HBM buffer via a direct HBM->HBM
    DMA Pallas kernel (useful only when a physically new buffer is required).
    """
    b = x.shape[0]
    flat = math.prod(x.shape[1:]) if x.ndim > 1 else 1

    # Row-major reshape == torch .view(B, -1).  Metadata only.
    x2d = x.reshape(b, flat)

    if not materialize or b == 0 or flat == 0:
        return x2d
    return _materialized_copy(x2d)


if __name__ == "__main__":
    key = jax.random.PRNGKey(0)
    # Small NCHW input consistent with a conv-style feature map: B=2, C=4, H=W=16
    x = jax.random.normal(key, (2, 4, 16, 16), dtype=jnp.float32)
    expected = x.reshape(x.shape[0], -1)

    # Default fast path: pure metadata reshape (no kernel).
    out_view = jax.block_until_ready(flatten_pallas(x))
    assert out_view.shape == (2, 4 * 16 * 16), out_view.shape
    assert out_view.dtype == x.dtype
    assert jnp.array_equal(out_view, expected)

    # Explicitly materialized copy: exercises the HBM->HBM DMA kernel.
    out_copy = jax.block_until_ready(flatten_pallas(x, materialize=True))
    assert out_copy.shape == (2, 4 * 16 * 16), out_copy.shape
    assert out_copy.dtype == x.dtype
    assert jnp.array_equal(out_copy, expected)

    # Second shape: non-multiple-of-128 flattened dim, larger batch.
    x2 = jax.random.normal(jax.random.PRNGKey(0), (16, 3, 8, 8), dtype=jnp.float32)
    out2 = jax.block_until_ready(flatten_pallas(x2, materialize=True))
    assert jnp.array_equal(out2, x2.reshape(16, -1))

    print("KERNEL_OK")
</pallas_src>

<mosaic_0001>
module attributes {stable_mosaic.version = 11 : i64} {
  func.func @kernel(%arg0: memref<2x1024xf32, #tpu.memory_space<any>>, %arg1: memref<2x1024xf32, #tpu.memory_space<any>>) attributes {dimension_semantics = [], scalar_prefetch = 0 : i64, scratch_operands = 0 : i64, tpu.core_type = #tpu.core_type<tc>} {
    "tpu.region"() ({
      %0 = tpu.sem_alloc : memref<1x!tpu.dma_semaphore, #tpu.memory_space<semaphore_mem>>
      %c0_i32 = arith.constant 0 : i32
      %1 = tpu.memref_slice %0[%c0_i32] : memref<1x!tpu.dma_semaphore, #tpu.memory_space<semaphore_mem>> -> memref<1x!tpu.dma_semaphore, #tpu.memory_space<semaphore_mem>>
      %2 = tpu.memref_squeeze %1 : memref<1x!tpu.dma_semaphore, #tpu.memory_space<semaphore_mem>> -> memref<!tpu.dma_semaphore, #tpu.memory_space<semaphore_mem>>
      tpu.enqueue_dma source(%arg0 : memref<2x1024xf32, #tpu.memory_space<any>>) target(%arg1 : memref<2x1024xf32, #tpu.memory_space<any>>) target_semaphore(%2 : memref<!tpu.dma_semaphore, #tpu.memory_space<semaphore_mem>>)
      %c0_i32_0 = arith.constant 0 : i32
      %3 = tpu.memref_slice %0[%c0_i32_0] : memref<1x!tpu.dma_semaphore, #tpu.memory_space<semaphore_mem>> -> memref<1x!tpu.dma_semaphore, #tpu.memory_space<semaphore_mem>>
      %4 = tpu.memref_squeeze %3 : memref<1x!tpu.dma_semaphore, #tpu.memory_space<semaphore_mem>> -> memref<!tpu.dma_semaphore, #tpu.memory_space<semaphore_mem>>
      tpu.wait_dma2 semaphore(%4 : memref<!tpu.dma_semaphore, #tpu.memory_space<semaphore_mem>>) src(%arg0 : memref<2x1024xf32, #tpu.memory_space<any>>) dst(%arg1 : memref<2x1024xf32, #tpu.memory_space<any>>)
      tpu.yield
    }) : () -> ()
    return
  }
}

</mosaic_0001>

<llo_original>
// kernel: tpu_custom_call.1
$region0: #{tpu_custom_call.1}
  #allocation0 [shape = 'u32[]', space=smem, size = 0x4, offset = 0x4, fixed_abs, tag = 'smem constant byte address 0x4 - core index']
  #allocation1 [shape = 'u32[72,128]{1,0:T(1,128)}', space=vmem, size = 0x9000, scoped, tag = 'internal scratch']
  #allocation3 [shape = 's32[]', space=sflag, size = 0x4, offset = 0, fixed_abs, tag = 'sflag constant byte address 0x0 - dummy sync flag']
  #allocation4 [shape = 'u32[0]{0}', space=smem, size = 0, offset = 0, fixed_abs, tag = 'smem constant byte address 0x0 - null']
  %s0 = inlined_call_operand.hbm [shape: f32[2,1024], index: 0, kind: input, shape index: {}]
  %s1 = inlined_call_operand.hbm [shape: f32[2,1024], index: 1, kind: output, shape index: {}]
  %s2 = sld [smem:[#allocation0]]
  $region3: #{tpu_custom_call.1} parent=0
    _
  %s4 = ssub.s32 1, %s2
  %s5 = scalar_select 0, %s4, %s2
  $region2: #{tpu_custom_call.1} parent=0
    #allocation2 [shape = 's32[1]{0}', space=sflag, size = 0x4, scoped, tag = 'scoped memory for tpu_custom_call.1']
    %s7 = sshll.u32 1, 14
    %s8 = sxor.u32 4294967295, %s7
    %s10 = sshll.u32 %s0, 4
    %s11 = int_to_ptr.hbm [resolvable:$true] %s10
    %s12 = sshll.u32 %s1, 4
    %s13 = int_to_ptr.hbm [resolvable:$true] %s12
    %16 = dma.general %s11, 256, %s13, [#allocation2], [#allocation3], [#allocation4], 0, 0
    %s17 = smul.u32 2, 1
    %s18 = smul.u32 %s17, 8
    %s19 = sshll.u32 %s18, 4
    %20 = dma.done [#allocation2], %s19

</llo_original>
